<compile_context>
chip_gen: v7x
topology: tpu7x:2x2x1
jax: 0.10.0
libtpu: 0.0.40
codegen_flags: <defaults>
</compile_context>

<pallas_src>
import functools
import math

import jax
import jax.numpy as jnp
from jax import lax
from jax.experimental import pallas as pl
from jax.experimental.pallas import tpu as pltpu

LEAKY_SLOPE = 0.01  # nn.LeakyReLU default negative_slope


def _linear_leaky_kernel(x_ref, w_ref, b_ref, *rest,
                         residual, use_img_norm, acc_in_out):
    # grid = (M tiles, N tiles, K tiles); K (last axis) is the reduction.
    if acc_in_out:
        if residual:
            xres_ref, o_ref = rest
        else:
            (o_ref,) = rest
        acc_ref = o_ref                    # f32 output block doubles as the accumulator
    else:
        if residual:
            xres_ref, o_ref, acc_ref = rest
        else:
            o_ref, acc_ref = rest

    k = pl.program_id(2)

    @pl.when(k == 0)
    def _():
        # Seed the accumulator with the broadcast bias (no epilogue bias add).
        acc_ref[...] = jnp.broadcast_to(
            b_ref[...].astype(jnp.float32), acc_ref.shape)

    # x block: (tm, tk); W block: (tk, tn) -- W is pre-transposed to (in, out)
    # in the wrapper, so this is a straight MXU matmul (no per-tile transpose).
    acc_ref[...] += jnp.dot(x_ref[...], w_ref[...],
                            preferred_element_type=jnp.float32)

    @pl.when(k == pl.num_programs(2) - 1)
    def _():
        y = acc_ref[...]
        y = jnp.maximum(y, LEAKY_SLOPE * y)          # LeakyReLU (mul + max)
        if use_img_norm:
            # Full feature dim lives in this tile (tn == dim, asserted in wrapper).
            # NOTE: no epsilon -- an all-zero row yields inf/NaN, exactly like
            # the PyTorch reference A / A.norm(dim=-1, keepdim=True).
            y = y * lax.rsqrt(jnp.sum(y * y, axis=-1, keepdims=True))
        if residual:
            y = y + xres_ref[...].astype(jnp.float32)
        o_ref[...] = y.astype(o_ref.dtype)


def _device_vmem_bytes():
    """Best-effort per-core VMEM capacity; conservative (v7x) fallback."""
    try:
        info = pltpu.get_tpu_info()
        cap = int(getattr(info, "vmem_capacity_bytes", 0) or 0)
        if cap > 0:
            return cap
    except Exception:
        pass
    try:
        kind = jax.devices()[0].device_kind.lower()
        if "v5" in kind or "v6" in kind:
            return 128 * 1024 * 1024
    except Exception:
        pass
    return 64 * 1024 * 1024


def _tensorcores_per_chip():
    """Best-effort TC count per chip (v7x has 2)."""
    try:
        kind = jax.devices()[0].device_kind.lower()
        if "7" in kind:
            return 2
    except Exception:
        pass
    return 1


def _pick_tile(n, candidates):
    """Largest candidate tile that evenly divides n; else full extent."""
    for c in candidates:
        if n % c == 0:
            return c
    return n


def prepare_linear_params(w, b, compute_dtype=jnp.bfloat16):
    """One-time prep of nn.Linear params: transpose W from (out, in) to
    (in, out) and cast to the MXU compute dtype, so the hot path pays neither
    a per-call cast pass nor a per-tile transpose."""
    return jnp.asarray(w).T.astype(compute_dtype), jnp.asarray(b).astype(jnp.float32)


def our_module_forward(x, w_t, b, *, residual=False, use_img_norm=False,
                       tm=None, tn=None, tk=None,
                       compute_dtype=jnp.bfloat16):
    """OurModule.forward (num_layers=1).

    x:   [M, dim]
    w_t: [dim, dim], ALREADY transposed to (in, out) layout and ideally already
         in compute_dtype (see prepare_linear_params). nn.Linear stores (out, in).
    b:   [dim]
    """
    M, dim = x.shape
    assert w_t.shape == (dim, dim) and b.shape == (dim,)

    acc_in_out = jnp.dtype(x.dtype) == jnp.dtype(jnp.float32)

    # ---- generation-aware tile candidates & VMEM budget ---------------------
    vmem_cap = _device_vmem_bytes()
    big_vmem = vmem_cap >= 100 * 1024 * 1024          # v5e / v6e: 128 MiB
    if big_vmem:
        vmem_budget = 100 * 1024 * 1024
        vmem_limit_cap = 110 * 1024 * 1024
        cand_mn = (1024, 512, 256, 128)
    else:                                             # v7x: 64 MiB per TC
        vmem_budget = 44 * 1024 * 1024
        vmem_limit_cap = 56 * 1024 * 1024
        cand_mn = (512, 256, 128)
    cand_m = cand_mn + (64, 32, 16, 8)

    if tm is None:
        tm = _pick_tile(M, cand_m)
    if tn is None:
        tn = dim if use_img_norm else _pick_tile(dim, cand_mn)
    if tk is None:
        tk = _pick_tile(dim, cand_mn)
    if use_img_norm:
        assert tn == dim, "row-norm epilogue needs the full feature dim in one tile"
        # TODO(synk): a two-pass variant (matmul pass + tiny normalize pass)
        # would lift the tn == dim constraint for very large dim on v7x.
    assert M % tm == 0 and dim % tn == 0 and dim % tk == 0

    in_bytes = jnp.dtype(compute_dtype).itemsize
    out_bytes = jnp.dtype(x.dtype).itemsize

    def footprint(tm_, tn_, tk_):
        v = 2 * (tm_ * tk_ + tk_ * tn_) * in_bytes    # x + W blocks (double-buffered)
        v += 2 * 8 * max(tn_, 128) * 4                # bias block (sublane/lane padded)
        v += 2 * tm_ * tn_ * out_bytes                # output block
        if residual:
            v += 2 * tm_ * tn_ * out_bytes            # residual x block
        if not acc_in_out:
            v += tm_ * tn_ * 4                        # separate f32 accumulator
        return v

    def can_halve_m(t):
        return t > 8 and (t // 2) % 8 == 0 and M % (t // 2) == 0

    def can_halve_k(t):
        return t > 128 and (t // 2) % 128 == 0 and dim % (t // 2) == 0

    # VMEM clamp: the img-norm path (tn == dim) is dominated by tm*dim terms,
    # so shrink tm first there; otherwise shrink tk first (preserves W reuse).
    if use_img_norm:
        while footprint(tm, tn, tk) > vmem_budget and can_halve_m(tm):
            tm //= 2
        while footprint(tm, tn, tk) > vmem_budget and can_halve_k(tk):
            tk //= 2
    else:
        while footprint(tm, tn, tk) > vmem_budget and can_halve_k(tk):
            tk //= 2
        while footprint(tm, tn, tk) > vmem_budget and can_halve_m(tm):
            tm //= 2

    # Megacore (v7x has 2 TCs): make sure the parallel (i, j) grid has >= 2 tiles.
    if _tensorcores_per_chip() >= 2 and (M // tm) * (dim // tn) < 2 and can_halve_m(tm):
        tm //= 2

    vmem_limit = int(min(max(footprint(tm, tn, tk) * 3 // 2,
                             32 * 1024 * 1024), vmem_limit_cap))

    # ---- operands ------------------------------------------------------------
    # Casts are no-ops if the caller already prepared the params / activations.
    x_mm = x if x.dtype == jnp.dtype(compute_dtype) else x.astype(compute_dtype)
    w_mm = w_t if w_t.dtype == jnp.dtype(compute_dtype) else w_t.astype(compute_dtype)
    b2 = b.reshape(1, dim).astype(jnp.float32)

    in_specs = [
        pl.BlockSpec((tm, tk), lambda i, j, k: (i, k)),   # x block
        pl.BlockSpec((tk, tn), lambda i, j, k: (k, j)),   # W (in, out) block
        pl.BlockSpec((1, tn), lambda i, j, k: (0, j)),    # bias
    ]
    inputs = [x_mm, w_mm, b2]
    if residual:
        # residual x block at full input precision, aligned to the output tile
        in_specs.append(pl.BlockSpec((tm, tn), lambda i, j, k: (i, j)))
        inputs.append(x)

    scratch_shapes = [] if acc_in_out else [pltpu.VMEM((tm, tn), jnp.float32)]

    kernel = functools.partial(_linear_leaky_kernel, residual=residual,
                               use_img_norm=use_img_norm, acc_in_out=acc_in_out)

    return pl.pallas_call(
        kernel,
        out_shape=jax.ShapeDtypeStruct((M, dim), x.dtype),
        grid_spec=pltpu.PrefetchScalarGridSpec(
            num_scalar_prefetch=0,
            grid=(M // tm, dim // tn, dim // tk),
            in_specs=in_specs,
            out_specs=pl.BlockSpec((tm, tn), lambda i, j, k: (i, j)),
            scratch_shapes=scratch_shapes,
        ),
        compiler_params=pltpu.CompilerParams(
            dimension_semantics=("parallel", "parallel", "arbitrary"),
            vmem_limit_bytes=vmem_limit,
        ),
    )(*inputs)


def init_linear_params(key, dim, dtype=jnp.float32):
    # Matches nn.Linear default init: U(-1/sqrt(fan_in), 1/sqrt(fan_in))
    kw, kb = jax.random.split(key)
    bound = 1.0 / math.sqrt(dim)
    w = jax.random.uniform(kw, (dim, dim), dtype, -bound, bound)  # [out, in]
    b = jax.random.uniform(kb, (dim,), dtype, -bound, bound)
    return w, b


def reference_forward(x, w, b, residual=False, use_img_norm=False,
                      compute_dtype=jnp.bfloat16):
    # Same bf16-operand / f32-accumulate precision path as the kernel.
    y = jnp.dot(x.astype(compute_dtype), w.astype(compute_dtype).T,
                preferred_element_type=jnp.float32) + b.astype(jnp.float32)
    y = jnp.where(y >= 0, y, LEAKY_SLOPE * y)
    if use_img_norm:
        y = y / jnp.linalg.norm(y, axis=-1, keepdims=True)
    if residual:
        y = y + x
    return y.astype(x.dtype)


if __name__ == "__main__":
    key = jax.random.PRNGKey(0)
    k_x, k_p = jax.random.split(key)

    batch, dim = 16, 256
    x = jax.random.normal(k_x, (batch, dim), jnp.float32)
    w, b = init_linear_params(k_p, dim)

    # One-time param prep: transpose to (in, out) + bf16 cast (hoisted off the hot path).
    w_t, b_f = prepare_linear_params(w, b)

    # default forward: residual=False, use_img_norm=False
    out = jax.block_until_ready(our_module_forward(x, w_t, b_f))
    ref = reference_forward(x, w, b)
    assert out.shape == (batch, dim)
    assert jnp.allclose(out, ref, atol=2e-3, rtol=2e-3)

    # fused residual + img-norm epilogue with a tiled reduction axis (tk < dim)
    out2 = jax.block_until_ready(
        our_module_forward(x, w_t, b_f, residual=True, use_img_norm=True, tk=128)
    )
    ref2 = reference_forward(x, w, b, residual=True, use_img_norm=True)
    assert jnp.allclose(out2, ref2, atol=2e-3, rtol=2e-3)

    print("KERNEL_OK")
</pallas_src>

<mosaic_0001>
module attributes {stable_mosaic.version = 11 : i64} {
  func.func @_linear_leaky_kernel(%arg0: i32, %arg1: i32, %arg2: i32, %arg3: memref<16x256xbf16, #tpu.memory_space<vmem>>, %arg4: memref<256x256xbf16, #tpu.memory_space<vmem>>, %arg5: memref<1x256xf32, #tpu.memory_space<vmem>>, %arg6: memref<16x256xf32, #tpu.memory_space<vmem>>) attributes {dimension_semantics = [#tpu.dimension_semantics<parallel>, #tpu.dimension_semantics<parallel>, #tpu.dimension_semantics<arbitrary>], iteration_bounds = array<i64: 1, 1, 1>, scalar_prefetch = 0 : i64, scratch_operands = 0 : i64, tpu.core_type = #tpu.core_type<tc>, window_params = [{transform_indices = @transform_0, window_bounds = array<i64: 16, 256>}, {transform_indices = @transform_1, window_bounds = array<i64: 256, 256>}, {transform_indices = @transform_2, window_bounds = array<i64: 1, 256>}, {transform_indices = @transform_3, window_bounds = array<i64: 16, 256>}]} {
    %c0_i32 = arith.constant 0 : i32
    %0 = arith.cmpi eq, %arg2, %c0_i32 : i32
    %1 = arith.extui %0 : i1 to i32
    %c0_i32_0 = arith.constant 0 : i32
    %2 = arith.cmpi ne, %1, %c0_i32_0 : i32
    scf.if %2 {
      %c0_10 = arith.constant 0 : index
      %c0_11 = arith.constant 0 : index
      %12 = vector.load %arg5[%c0_10, %c0_11] : memref<1x256xf32, #tpu.memory_space<vmem>>, vector<1x256xf32>
      %13 = vector.shape_cast %12 : vector<1x256xf32> to vector<1x256xf32>
      %14 = vector.broadcast %13 : vector<1x256xf32> to vector<16x256xf32>
      %c0_12 = arith.constant 0 : index
      %c0_13 = arith.constant 0 : index
      %15 = vector.load %arg6[%c0_12, %c0_13] : memref<16x256xf32, #tpu.memory_space<vmem>>, vector<16x256xf32>
      tpu.vector_store %arg6[%c0_12, %c0_13], %14 {strides = array<i32>} : memref<16x256xf32, #tpu.memory_space<vmem>>, vector<16x256xf32>,
    } else {
    }
    %c0 = arith.constant 0 : index
    %c0_1 = arith.constant 0 : index
    %3 = vector.load %arg6[%c0, %c0_1] : memref<16x256xf32, #tpu.memory_space<vmem>>, vector<16x256xf32>
    %c0_2 = arith.constant 0 : index
    %c0_3 = arith.constant 0 : index
    %4 = vector.load %arg3[%c0_2, %c0_3] : memref<16x256xbf16, #tpu.memory_space<vmem>>, vector<16x256xbf16>
    %c0_4 = arith.constant 0 : index
    %c0_5 = arith.constant 0 : index
    %5 = vector.load %arg4[%c0_4, %c0_5] : memref<256x256xbf16, #tpu.memory_space<vmem>>, vector<256x256xbf16>
    %cst = arith.constant dense<0.000000e+00> : vector<16x256xf32>
    %6 = tpu.matmul %4, %5, %cst {dimension_numbers = #tpu.dot_dimension_numbers<[1], [0], [0], [1], [0, 0, 1, 1], [], []>} : vector<16x256xbf16>, vector<256x256xbf16>, vector<16x256xf32> -> vector<16x256xf32>
    %7 = arith.addf %3, %6 : vector<16x256xf32>
    %c0_6 = arith.constant 0 : index
    %c0_7 = arith.constant 0 : index
    %8 = vector.load %arg6[%c0_6, %c0_7] : memref<16x256xf32, #tpu.memory_space<vmem>>, vector<16x256xf32>
    tpu.vector_store %arg6[%c0_6, %c0_7], %7 {strides = array<i32>} : memref<16x256xf32, #tpu.memory_space<vmem>>, vector<16x256xf32>,
    %c0_i32_8 = arith.constant 0 : i32
    %9 = arith.cmpi eq, %arg2, %c0_i32_8 : i32
    %10 = arith.extui %9 : i1 to i32
    %c0_i32_9 = arith.constant 0 : i32
    %11 = arith.cmpi ne, %10, %c0_i32_9 : i32
    scf.if %11 {
      %c0_10 = arith.constant 0 : index
      %c0_11 = arith.constant 0 : index
      %12 = vector.load %arg6[%c0_10, %c0_11] : memref<16x256xf32, #tpu.memory_space<vmem>>, vector<16x256xf32>
      %cst_12 = arith.constant 0.00999999977 : f32
      %13 = vector.broadcast %cst_12 : f32 to vector<16x256xf32>
      %14 = arith.mulf %13, %12 : vector<16x256xf32>
      %15 = arith.maximumf %12, %14 : vector<16x256xf32>
      %c0_13 = arith.constant 0 : index
      %c0_14 = arith.constant 0 : index
      %16 = vector.load %arg6[%c0_13, %c0_14] : memref<16x256xf32, #tpu.memory_space<vmem>>, vector<16x256xf32>
      tpu.vector_store %arg6[%c0_13, %c0_14], %15 {strides = array<i32>} : memref<16x256xf32, #tpu.memory_space<vmem>>, vector<16x256xf32>,
    } else {
    }
    return
  }
  func.func @transform_0(%arg0: i32, %arg1: i32, %arg2: i32) -> (i32, i32) {
    %c0_i32 = arith.constant 0 : i32
    return %arg0, %arg2 : i32, i32
  }
  func.func @transform_1(%arg0: i32, %arg1: i32, %arg2: i32) -> (i32, i32) {
    %c0_i32 = arith.constant 0 : i32
    return %arg2, %arg1 : i32, i32
  }
  func.func @transform_2(%arg0: i32, %arg1: i32, %arg2: i32) -> (i32, i32) {
    %c0_i32 = arith.constant 0 : i32
    %c0_i32_0 = arith.constant 0 : i32
    return %c0_i32, %arg1 : i32, i32
  }
  func.func @transform_3(%arg0: i32, %arg1: i32, %arg2: i32) -> (i32, i32) {
    %c0_i32 = arith.constant 0 : i32
    return %arg0, %arg1 : i32, i32
  }
}

</mosaic_0001>

<llo_original>
// kernel: tpu_custom_call.1
$region0: #{tpu_custom_call.1}
  #allocation0 [shape = 'u32[]', space=smem, size = 0x4, offset = 0x4, fixed_abs, tag = 'smem constant byte address 0x4 - core index']
  #allocation1 [shape = 'u32[144,128]{1,0:T(1,128)}', space=vmem, size = 0x12000, scoped, tag = 'internal scratch']
  %s0 = inlined_call_operand.hbm [shape: bf16[16,256], index: 0, kind: input, shape index: {}]
  %s1 = inlined_call_operand.hbm [shape: bf16[256,256], index: 1, kind: input, shape index: {}]
  %s2 = inlined_call_operand.vmem [shape: f32[1,256], index: 2, kind: input, shape index: {}]
  %s3 = inlined_call_operand.hbm [shape: f32[16,256], index: 3, kind: output, shape index: {}]
  %s4 = sld [smem:[#allocation0]]
  $region38: #{tpu_custom_call.1} parent=0
    _
  %s6 = ssub.s32 1, %s4
  %s7 = scalar_select 0, %s6, %s4
  $region1: #{tpu_custom_call.1} parent=0
    #allocation2 [shape = 'u8[8192]{0}', space=vmem, size = 0x2000, scoped, tag = 'input window, operand 0, single buffered']
    #allocation3 [shape = 's32[1]{0}', space=sflag, size = 0x4, scoped, tag = 'scoped memory for tpu_custom_call.1']
    #allocation4 [shape = 's32[1]{0}', space=sflag, size = 0x4, scoped, tag = 'scoped memory for tpu_custom_call.1']
    #allocation5 [shape = 'u8[131072]{0}', space=vmem, size = 0x20000, scoped, tag = 'input window, operand 1, single buffered']
    #allocation6 [shape = 's32[1]{0}', space=sflag, size = 0x4, scoped, tag = 'scoped memory for tpu_custom_call.1']
    #allocation7 [shape = 'u8[16384]{0}', space=vmem, size = 0x4000, scoped, tag = 'output window, operand 0, single buffered']
    %8 = vsyncpa [#allocation3], 0
    %9 = vsyncpa [#allocation6], 0
    %10 = vsyncpa [#allocation4], 0
    // Predicated region
    $region2: #{tpu_custom_call.1} parent=1 // pred_check
      _
    $region3: #{tpu_custom_call.1} parent=1 // pred_check_branch
      %12 = sbr.rel (0) target = $region5
    $region4: #{tpu_custom_call.1} parent=1 // pred_region
      %s14 = ssub.s32 256, 256
      %15 = vsyncadd [#allocation3], %s14
      %s16 = sshll.u32 [#allocation2], 4
      %s17 = int_to_ptr.vmem [resolvable:$true] %s16
      %22 = dma.hbm_to_vmem [thread:$0]  %s0, 256, %s17, [#allocation3], 128, 128, 8
    $region5: #{tpu_custom_call.1} parent=1 // pred_fallthru
      _
    // Predicated region
    $region6: #{tpu_custom_call.1} parent=1 // pred_check
      _
    $region7: #{tpu_custom_call.1} parent=1 // pred_check_branch
      %24 = sbr.rel (0) target = $region9
    $region8: #{tpu_custom_call.1} parent=1 // pred_region
      %s26 = ssub.s32 4096, 4096
      %27 = vsyncadd [#allocation6], %s26
      %s28 = sshll.u32 [#allocation5], 4
      %s29 = int_to_ptr.vmem [resolvable:$true] %s28
      %34 = dma.hbm_to_vmem [thread:$0]  %s1, 4096, %s29, [#allocation6], 128, 128, 8
    $region9: #{tpu_custom_call.1} parent=1 // pred_fallthru
      _
    // Predicated region
    $region10: #{tpu_custom_call.1} parent=1 // pred_check
      _
    $region11: #{tpu_custom_call.1} parent=1 // pred_check_branch
      %36 = sbr.rel (0) target = $region13
    $region12: #{tpu_custom_call.1} parent=1 // pred_region
      _
    $region13: #{tpu_custom_call.1} parent=1 // pred_fallthru
      _
    // Predicated region
    $region14: #{tpu_custom_call.1} parent=1 // pred_check
      _
    $region15: #{tpu_custom_call.1} parent=1 // pred_check_branch
      %38 = sbr.rel (0) target = $region17
    $region16: #{tpu_custom_call.1} parent=1 // pred_region
      %39 = dma.done [#allocation3], 256
    $region17: #{tpu_custom_call.1} parent=1 // pred_fallthru
      _
    // Predicated region
    $region18: #{tpu_custom_call.1} parent=1 // pred_check
      _
    $region19: #{tpu_custom_call.1} parent=1 // pred_check_branch
      %41 = sbr.rel (0) target = $region21
    $region20: #{tpu_custom_call.1} parent=1 // pred_region
      %42 = dma.done [#allocation6], 4096
    $region21: #{tpu_custom_call.1} parent=1 // pred_fallthru
      _
    %p43 = scmp.eq.s32.totalorder 0, 0
    // Predicated region
    $region22: #{tpu_custom_call.1} parent=1 // pred_check
      %p44 = pneg %p43
    $region23: #{tpu_custom_call.1} parent=1 // pred_check_branch
      %46 = sbr.rel (%p44) target = $region25
    $region24: #{tpu_custom_call.1} parent=1 // pred_region
      %v47 = vld [vmem:[%s2] sm:$0x3]
      %v49 = vlaneseq
      %v50 = vshrl.u32 %v49, 7
      %v51 = vsub.s32 0, %v50
      %v52 = vrot.slane %v47, %v51
      %v53 = vlaneseq
      %v54 = vshrl.u32 %v53, 7
      %v55 = vsub.s32 1, %v54
      %v56 = vrot.slane %v47, %v55
      %59 = vst [vmem:[#allocation7] sm:$0xff] %v52
      %60 = vst [vmem:[#allocation7 + $0x8] sm:$0xff] %v56
      %61 = vst [vmem:[#allocation7 + $0x10] sm:$0xff] %v52
      %62 = vst [vmem:[#allocation7 + $0x18] sm:$0xff] %v56
    $region25: #{tpu_custom_call.1} parent=1 // pred_fallthru
      _
    %v63 = vld [vmem:[#allocation7] sm:$0xff]
    %v64 = vld [vmem:[#allocation7 + $0x8] sm:$0xff]
    %v65 = vld [vmem:[#allocation7 + $0x10] sm:$0xff]
    %v66 = vld [vmem:[#allocation7 + $0x18] sm:$0xff]
    %v67 = vld [vmem:[#allocation2] sm:$0xff]
    %v68 = vld [vmem:[#allocation2 + $0x8] sm:$0xff]
    %v69 = vld [vmem:[#allocation5] sm:$0xff]
    %v70 = vld [vmem:[#allocation5 + $0x8] sm:$0xff]
    %v71 = vld [vmem:[#allocation5 + $0x10] sm:$0xff]
    %v72 = vld [vmem:[#allocation5 + $0x18] sm:$0xff]
    %v73 = vld [vmem:[#allocation5 + $0x20] sm:$0xff]
    %v74 = vld [vmem:[#allocation5 + $0x28] sm:$0xff]
    %v75 = vld [vmem:[#allocation5 + $0x30] sm:$0xff]
    %v76 = vld [vmem:[#allocation5 + $0x38] sm:$0xff]
    %v77 = vld [vmem:[#allocation5 + $0x40] sm:$0xff]
    %v78 = vld [vmem:[#allocation5 + $0x48] sm:$0xff]
    %v79 = vld [vmem:[#allocation5 + $0x50] sm:$0xff]
    %v80 = vld [vmem:[#allocation5 + $0x58] sm:$0xff]
    %v81 = vld [vmem:[#allocation5 + $0x60] sm:$0xff]
    %v82 = vld [vmem:[#allocation5 + $0x68] sm:$0xff]
    %v83 = vld [vmem:[#allocation5 + $0x70] sm:$0xff]
    %v84 = vld [vmem:[#allocation5 + $0x78] sm:$0xff]
    %v85 = vld [vmem:[#allocation5 + $0x80] sm:$0xff]
    %v86 = vld [vmem:[#allocation5 + $0x88] sm:$0xff]
    %v87 = vld [vmem:[#allocation5 + $0x90] sm:$0xff]
    %v88 = vld [vmem:[#allocation5 + $0x98] sm:$0xff]
    %v89 = vld [vmem:[#allocation5 + $0xa0] sm:$0xff]
    %v90 = vld [vmem:[#allocation5 + $0xa8] sm:$0xff]
    %v91 = vld [vmem:[#allocation5 + $0xb0] sm:$0xff]
    %v92 = vld [vmem:[#allocation5 + $0xb8] sm:$0xff]
    %v93 = vld [vmem:[#allocation5 + $0xc0] sm:$0xff]
    %v94 = vld [vmem:[#allocation5 + $0xc8] sm:$0xff]
    %v95 = vld [vmem:[#allocation5 + $0xd0] sm:$0xff]
    %v96 = vld [vmem:[#allocation5 + $0xd8] sm:$0xff]
    %v97 = vld [vmem:[#allocation5 + $0xe0] sm:$0xff]
    %v98 = vld [vmem:[#allocation5 + $0xe8] sm:$0xff]
    %v99 = vld [vmem:[#allocation5 + $0xf0] sm:$0xff]
    %v100 = vld [vmem:[#allocation5 + $0xf8] sm:$0xff]
    %v103 = vunpack.c.l.b16 %v67
    %v104 = vunpack.c.h.b16 %v67
    %v105 = vunpack.c.l.b16 %v68
    %v106 = vunpack.c.h.b16 %v68
    %v107 = vpack.c.b16 %v105, %v103
    %v108 = vpack.c.b16 %v106, %v104
    %v143 = vunpack.c.l.b16 %v69
    %v144 = vunpack.c.h.b16 %v69
    %v145 = vunpack.c.l.b16 %v70
    %v146 = vunpack.c.h.b16 %v70
    %v147 = vunpack.c.l.b16 %v71
    %v148 = vunpack.c.h.b16 %v71
    %v149 = vunpack.c.l.b16 %v72
    %v150 = vunpack.c.h.b16 %v72
    %v151 = vunpack.c.l.b16 %v73
    %v152 = vunpack.c.h.b16 %v73
    %v153 = vunpack.c.l.b16 %v74
    %v154 = vunpack.c.h.b16 %v74
    %v155 = vunpack.c.l.b16 %v75
    %v156 = vunpack.c.h.b16 %v75
    %v157 = vunpack.c.l.b16 %v76
    %v158 = vunpack.c.h.b16 %v76
    %v159 = vunpack.c.l.b16 %v77
    %v160 = vunpack.c.h.b16 %v77
    %v161 = vunpack.c.l.b16 %v78
    %v162 = vunpack.c.h.b16 %v78
    %v163 = vunpack.c.l.b16 %v79
    %v164 = vunpack.c.h.b16 %v79
    %v165 = vunpack.c.l.b16 %v80
    %v166 = vunpack.c.h.b16 %v80
    %v167 = vunpack.c.l.b16 %v81
    %v168 = vunpack.c.h.b16 %v81
    %v169 = vunpack.c.l.b16 %v82
    %v170 = vunpack.c.h.b16 %v82
    %v171 = vunpack.c.l.b16 %v83
    %v172 = vunpack.c.h.b16 %v83
    %v173 = vunpack.c.l.b16 %v84
    %v174 = vunpack.c.h.b16 %v84
    %v175 = vunpack.c.l.b16 %v85
    %v176 = vunpack.c.h.b16 %v85
    %v177 = vunpack.c.l.b16 %v86
    %v178 = vunpack.c.h.b16 %v86
    %v179 = vunpack.c.l.b16 %v87
    %v180 = vunpack.c.h.b16 %v87
    %v181 = vunpack.c.l.b16 %v88
    %v182 = vunpack.c.h.b16 %v88
    %v183 = vunpack.c.l.b16 %v89
    %v184 = vunpack.c.h.b16 %v89
    %v185 = vunpack.c.l.b16 %v90
    %v186 = vunpack.c.h.b16 %v90
    %v187 = vunpack.c.l.b16 %v91
    %v188 = vunpack.c.h.b16 %v91
    %v189 = vunpack.c.l.b16 %v92
    %v190 = vunpack.c.h.b16 %v92
    %v191 = vunpack.c.l.b16 %v93
    %v192 = vunpack.c.h.b16 %v93
    %v193 = vunpack.c.l.b16 %v94
    %v194 = vunpack.c.h.b16 %v94
    %v195 = vunpack.c.l.b16 %v95
    %v196 = vunpack.c.h.b16 %v95
    %v197 = vunpack.c.l.b16 %v96
    %v198 = vunpack.c.h.b16 %v96
    %v199 = vunpack.c.l.b16 %v97
    %v200 = vunpack.c.h.b16 %v97
    %v201 = vunpack.c.l.b16 %v98
    %v202 = vunpack.c.h.b16 %v98
    %v203 = vunpack.c.l.b16 %v99
    %v204 = vunpack.c.h.b16 %v99
    %v205 = vunpack.c.l.b16 %v100
    %v206 = vunpack.c.h.b16 %v100
    %v207 = vpack.c.b16 %v145, %v143
    %v208 = vpack.c.b16 %v146, %v144
    %v209 = vpack.c.b16 %v149, %v147
    %v210 = vpack.c.b16 %v150, %v148
    %v211 = vpack.c.b16 %v153, %v151
    %v212 = vpack.c.b16 %v154, %v152
    %v213 = vpack.c.b16 %v157, %v155
    %v214 = vpack.c.b16 %v158, %v156
    %v215 = vpack.c.b16 %v161, %v159
    %v216 = vpack.c.b16 %v162, %v160
    %v217 = vpack.c.b16 %v165, %v163
    %v218 = vpack.c.b16 %v166, %v164
    %v219 = vpack.c.b16 %v169, %v167
    %v220 = vpack.c.b16 %v170, %v168
    %v221 = vpack.c.b16 %v173, %v171
    %v222 = vpack.c.b16 %v174, %v172
    %v223 = vpack.c.b16 %v177, %v175
    %v224 = vpack.c.b16 %v178, %v176
    %v225 = vpack.c.b16 %v181, %v179
    %v226 = vpack.c.b16 %v182, %v180
    %v227 = vpack.c.b16 %v185, %v183
    %v228 = vpack.c.b16 %v186, %v184
    %v229 = vpack.c.b16 %v189, %v187
    %v230 = vpack.c.b16 %v190, %v188
    %v231 = vpack.c.b16 %v193, %v191
    %v232 = vpack.c.b16 %v194, %v192
    %v233 = vpack.c.b16 %v197, %v195
    %v234 = vpack.c.b16 %v198, %v196
    %v235 = vpack.c.b16 %v201, %v199
    %v236 = vpack.c.b16 %v202, %v200
    %v237 = vpack.c.b16 %v205, %v203
    %v238 = vpack.c.b16 %v206, %v204
    %271 = vmatprep.subr.bf16.mxu0 %v208
    %272 = vmatpush1.bf16.msra.mxu0 %v207
    %273 = vmatprep.subr.bf16.mxu0 %v210
    %274 = vmatpush1.bf16.msra.mxu0 %v209
    %275 = vmatprep.subr.bf16.mxu0 %v212
    %276 = vmatpush1.bf16.msra.mxu0 %v211
    %277 = vmatprep.subr.bf16.mxu0 %v214
    %278 = vmatpush1.bf16.msra.mxu0 %v213
    %279 = vmatprep.subr.bf16.mxu0 %v216
    %280 = vmatpush1.bf16.msra.mxu0 %v215
    %281 = vmatprep.subr.bf16.mxu0 %v218
    %282 = vmatpush1.bf16.msra.mxu0 %v217
    %283 = vmatprep.subr.bf16.mxu0 %v220
    %284 = vmatpush1.bf16.msra.mxu0 %v219
    %285 = vmatprep.subr.bf16.mxu0 %v222
    %286 = vmatpush1.bf16.msra.mxu0 %v221
    %287 = vmatprep.subr.bf16.mxu0 %v224
    %288 = vmatpush1.bf16.msra.mxu0 %v223
    %289 = vmatprep.subr.bf16.mxu0 %v226
    %290 = vmatpush1.bf16.msra.mxu0 %v225
    %291 = vmatprep.subr.bf16.mxu0 %v228
    %292 = vmatpush1.bf16.msra.mxu0 %v227
    %293 = vmatprep.subr.bf16.mxu0 %v230
    %294 = vmatpush1.bf16.msra.mxu0 %v229
    %295 = vmatprep.subr.bf16.mxu0 %v232
    %296 = vmatpush1.bf16.msra.mxu0 %v231
    %297 = vmatprep.subr.bf16.mxu0 %v234
    %298 = vmatpush1.bf16.msra.mxu0 %v233
    %299 = vmatprep.subr.bf16.mxu0 %v236
    %300 = vmatpush1.bf16.msra.mxu0 %v235
    %301 = vmatprep.subr.bf16.mxu0 %v238
    %302 = vmatpush1.bf16.msra.mxu0 %v237
    %303 = vmatprep.mubr.bf16.mxu0 %v108
    %304 = vmatmul.mubr.bf16.gmra.mrb[0].mxu0 %v107
    %v305 = vpop.f32.mrb[0].mxu0
    %v306 = vadd.f32 0.0, %v305
    %v307 = vpop.f32.mrb[0].mxu0
    %v308 = vadd.f32 0.0, %v307
    %v309 = vpop.f32.mrb[0].mxu0
    %v310 = vadd.f32 0.0, %v309
    %v311 = vpop.f32.mrb[0].mxu0
    %v312 = vadd.f32 0.0, %v311
    %313 = vdwg.mxu0
    %v314 = vadd.f32 %v63, %v306
    %v315 = vadd.f32 %v64, %v308
    %v316 = vadd.f32 %v65, %v310
    %v317 = vadd.f32 %v66, %v312
    %318 = vst [vmem:[#allocation7] sm:$0xff] %v314
    %319 = vst [vmem:[#allocation7 + $0x8] sm:$0xff] %v315
    %320 = vst [vmem:[#allocation7 + $0x10] sm:$0xff] %v316
    %321 = vst [vmem:[#allocation7 + $0x18] sm:$0xff] %v317
    // Predicated region
    $region26: #{tpu_custom_call.1} parent=1 // pred_check
      %p322 = pneg %p43
    $region27: #{tpu_custom_call.1} parent=1 // pred_check_branch
      %324 = sbr.rel (%p322) target = $region29
    $region28: #{tpu_custom_call.1} parent=1 // pred_region
      %v325 = vld [vmem:[#allocation7] sm:$0xff]
      %v326 = vld [vmem:[#allocation7 + $0x8] sm:$0xff]
      %v327 = vld [vmem:[#allocation7 + $0x10] sm:$0xff]
      %v328 = vld [vmem:[#allocation7 + $0x18] sm:$0xff]
      %v329 = vmul.f32 %v325, 0.01
      %v330 = vmul.f32 %v326, 0.01
      %v331 = vmul.f32 %v327, 0.01
      %v332 = vmul.f32 %v328, 0.01
      %v333 = vmax.f32 %v325, %v329
      %v334 = vmax.f32 %v326, %v330
      %v335 = vmax.f32 %v327, %v331
      %v336 = vmax.f32 %v328, %v332
      %337 = vst [vmem:[#allocation7] sm:$0xff] %v333
      %338 = vst [vmem:[#allocation7 + $0x8] sm:$0xff] %v334
      %339 = vst [vmem:[#allocation7 + $0x10] sm:$0xff] %v335
      %340 = vst [vmem:[#allocation7 + $0x18] sm:$0xff] %v336
    $region29: #{tpu_custom_call.1} parent=1 // pred_fallthru
      _
    // Predicated region
    $region30: #{tpu_custom_call.1} parent=1 // pred_check
      _
    $region31: #{tpu_custom_call.1} parent=1 // pred_check_branch
      %342 = sbr.rel (0) target = $region33
    $region32: #{tpu_custom_call.1} parent=1 // pred_region
      %s344 = ssub.s32 512, 512
      %345 = vsyncadd [#allocation4], %s344
      %s346 = sshll.u32 [#allocation7], 4
      %s347 = int_to_ptr.vmem [resolvable:$true] %s346
      %352 = dma.vmem_to_hbm [thread:$0]  %s347, 512, %s3, [#allocation4], 256, 256, 16
    $region33: #{tpu_custom_call.1} parent=1 // pred_fallthru
      _
    // Predicated region
    $region34: #{tpu_custom_call.1} parent=1 // pred_check
      _
    $region35: #{tpu_custom_call.1} parent=1 // pred_check_branch
      %354 = sbr.rel (0) target = $region37
    $region36: #{tpu_custom_call.1} parent=1 // pred_region
      %355 = dma.done [#allocation4], 512
    $region37: #{tpu_custom_call.1} parent=1 // pred_fallthru
      _
    %356 = vsyncpa [#allocation3], 1
    %357 = vsyncpa [#allocation6], 1
    %358 = vsyncpa [#allocation4], 1

</llo_original>
